<compile_context>
chip_gen: v6e
topology: v6e:2x2x1
jax: 0.10.0
libtpu: 0.0.40
codegen_flags: <defaults>
</compile_context>

<pallas_src>
import jax
import jax.numpy as jnp
from jax.experimental import pallas as pl
from jax.experimental.pallas import tpu as pltpu

LANE = 128  # f32 lane width


def _round_up(n, m):
    return ((n + m - 1) // m) * m


def nn_baseline_kernel(xt_ref, w1_ref, b1_ref, w2_ref, b2_ref, o_ref):
    # Layer 1 on the MXU: (H_pad, K_pad) @ (K_pad, TILE_B) -> (H_pad, TILE_B).
    h = jnp.dot(w1_ref[...], xt_ref[...], preferred_element_type=jnp.float32)
    # Bias lane-broadcast + relu on the VPU.
    h = jnp.maximum(h + b1_ref[...], 0.0)
    # Layer 2: 1-wide matmul replaced by VPU multiply + XLU sublane reduction,
    # producing a lane-dense (1, TILE_B) row (batch on the lane axis).
    out = jnp.sum(h * w2_ref[...], axis=0, keepdims=True)
    # Scalar bias from SMEM, tanh on the EUP.
    o_ref[...] = jnp.tanh(out + b2_ref[0])


def nn_baseline_forward(x, w1, b1, w2, b2, *, tile_b=512):
    """x: (B, n_input); w1: (n_input, n_hidden); b1: (1, n_hidden);
       w2: (n_hidden, 1); b2: (1, 1).  Returns (B, 1) float32."""
    B, K = x.shape
    H = w1.shape[1]

    K_pad = _round_up(K, LANE)
    H_pad = _round_up(H, LANE)
    tile_b = max(LANE, (tile_b // LANE) * LANE)
    tile_b = min(tile_b, _round_up(B, LANE))
    B_pad = _round_up(B, tile_b)

    f32 = jnp.float32
    # Zero-pad and transpose so the batch sits on the lane axis in-kernel.
    xt = jnp.zeros((K_pad, B_pad), f32).at[:K, :B].set(x.astype(f32).T)
    w1t = jnp.zeros((H_pad, K_pad), f32).at[:H, :K].set(w1.astype(f32).T)
    b1c = jnp.zeros((H_pad, 1), f32).at[:H, 0].set(b1.astype(f32)[0])
    w2c = jnp.zeros((H_pad, 1), f32).at[:H, :].set(w2.astype(f32))
    b2s = b2.astype(f32).reshape((1,))

    grid = (B_pad // tile_b,)
    out_t = pl.pallas_call(
        nn_baseline_kernel,
        out_shape=jax.ShapeDtypeStruct((1, B_pad), f32),
        grid=grid,
        in_specs=[
            pl.BlockSpec((K_pad, tile_b), lambda i: (0, i)),   # x^T tile (streamed)
            pl.BlockSpec((H_pad, K_pad), lambda i: (0, 0)),    # w1 (VMEM-resident)
            pl.BlockSpec((H_pad, 1), lambda i: (0, 0)),        # b1 column (resident)
            pl.BlockSpec((H_pad, 1), lambda i: (0, 0)),        # w2 column (resident)
            pl.BlockSpec(memory_space=pltpu.SMEM),             # b2 scalar
        ],
        out_specs=pl.BlockSpec((1, tile_b), lambda i: (0, i)),  # lane-dense output row
        compiler_params=pltpu.CompilerParams(
            dimension_semantics=("parallel",)),
    )(xt, w1t, b1c, w2c, b2s)

    # Back to the module's (B, 1) layout; drop batch padding.
    return out_t[0, :B].reshape(B, 1)


def init_params(key, n_input, n_hidden):
    """Deterministic PyTorch-style init: U(-1/sqrt(fan_in), +1/sqrt(fan_in))."""
    k1, k2, k3, k4 = jax.random.split(key, 4)
    lim1 = 1.0 / jnp.sqrt(jnp.float32(n_input))
    lim2 = 1.0 / jnp.sqrt(jnp.float32(n_hidden))
    # stored as (in, out) == transpose of torch's (out, in) weight
    w1 = jax.random.uniform(k1, (n_input, n_hidden), jnp.float32, -lim1, lim1)
    b1 = jax.random.uniform(k2, (1, n_hidden), jnp.float32, -lim1, lim1)
    w2 = jax.random.uniform(k3, (n_hidden, 1), jnp.float32, -lim2, lim2)
    b2 = jax.random.uniform(k4, (1, 1), jnp.float32, -lim2, lim2)
    return w1, b1, w2, b2


def _ref(x, w1, b1, w2, b2):
    return jnp.tanh(jnp.maximum(x @ w1 + b1, 0.0) @ w2 + b2)


if __name__ == "__main__":
    n_input, n_hidden = 17, 32   # HalfCheetah obs dim = 17

    key = jax.random.PRNGKey(0)
    kx, kp, kx2 = jax.random.split(key, 3)
    w1, b1, w2, b2 = init_params(kp, n_input, n_hidden)

    # Small batch (single grid step, padded to one 128-wide tile).
    batch = 8
    x = jax.random.normal(kx, (batch, n_input), jnp.float32)
    out = jax.block_until_ready(nn_baseline_forward(x, w1, b1, w2, b2))
    ref = _ref(x, w1, b1, w2, b2)
    assert out.shape == (batch, 1)
    assert jnp.allclose(out, ref, atol=1e-5, rtol=1e-5)

    # Non-multiple batch with a multi-step grid (exercises tiling + remainder).
    batch2 = 300
    x2 = jax.random.normal(kx2, (batch2, n_input), jnp.float32)
    out2 = jax.block_until_ready(
        nn_baseline_forward(x2, w1, b1, w2, b2, tile_b=128))
    ref2 = _ref(x2, w1, b1, w2, b2)
    assert out2.shape == (batch2, 1)
    assert jnp.allclose(out2, ref2, atol=1e-5, rtol=1e-5)

    print("KERNEL_OK")
</pallas_src>

<mosaic_0001>
module attributes {stable_mosaic.version = 11 : i64} {
  func.func @nn_baseline_kernel(%arg0: i32, %arg1: memref<128x128xf32, #tpu.memory_space<vmem>>, %arg2: memref<128x128xf32, #tpu.memory_space<vmem>>, %arg3: memref<128x1xf32, #tpu.memory_space<vmem>>, %arg4: memref<128x1xf32, #tpu.memory_space<vmem>>, %arg5: memref<1xf32, #tpu.memory_space<smem>>, %arg6: memref<1x128xf32, #tpu.memory_space<vmem>>) attributes {dimension_semantics = [#tpu.dimension_semantics<parallel>], iteration_bounds = array<i64: 1>, scalar_prefetch = 0 : i64, scratch_operands = 0 : i64, tpu.core_type = #tpu.core_type<tc>, window_params = [{transform_indices = @transform_0, window_bounds = array<i64: 128, 128>}, {pipeline_mode = #tpu.pipeline_mode<synchronous>, transform_indices = @transform_1, window_bounds = array<i64: 128, 128>}, {pipeline_mode = #tpu.pipeline_mode<synchronous>, transform_indices = @transform_2, window_bounds = array<i64: 128, 1>}, {pipeline_mode = #tpu.pipeline_mode<synchronous>, transform_indices = @transform_3, window_bounds = array<i64: 128, 1>}, {transform_indices = @transform_4, window_bounds = array<i64: 1>}, {transform_indices = @transform_5, window_bounds = array<i64: 1, 128>}]} {
    %c0 = arith.constant 0 : index
    %c0_0 = arith.constant 0 : index
    %0 = vector.load %arg2[%c0, %c0_0] : memref<128x128xf32, #tpu.memory_space<vmem>>, vector<128x128xf32>
    %c0_1 = arith.constant 0 : index
    %c0_2 = arith.constant 0 : index
    %1 = vector.load %arg1[%c0_1, %c0_2] : memref<128x128xf32, #tpu.memory_space<vmem>>, vector<128x128xf32>
    %cst = arith.constant dense<0.000000e+00> : vector<128x128xf32>
    %2 = tpu.matmul %0, %1, %cst {dimension_numbers = #tpu.dot_dimension_numbers<[1], [0], [0], [1], [0, 0, 1, 1], [], []>} : vector<128x128xf32>, vector<128x128xf32>, vector<128x128xf32> -> vector<128x128xf32>
    %c0_3 = arith.constant 0 : index
    %c0_4 = arith.constant 0 : index
    %3 = vector.load %arg3[%c0_3, %c0_4] : memref<128x1xf32, #tpu.memory_space<vmem>>, vector<128x1xf32>
    %4 = vector.broadcast %3 : vector<128x1xf32> to vector<128x128xf32>
    %5 = arith.addf %2, %4 : vector<128x128xf32>
    %cst_5 = arith.constant 0.000000e+00 : f32
    %6 = vector.broadcast %cst_5 : f32 to vector<128x128xf32>
    %7 = arith.maximumf %5, %6 : vector<128x128xf32>
    %c0_6 = arith.constant 0 : index
    %c0_7 = arith.constant 0 : index
    %8 = vector.load %arg4[%c0_6, %c0_7] : memref<128x1xf32, #tpu.memory_space<vmem>>, vector<128x1xf32>
    %9 = vector.broadcast %8 : vector<128x1xf32> to vector<128x128xf32>
    %10 = arith.mulf %7, %9 : vector<128x128xf32>
    %cst_8 = arith.constant dense<0.000000e+00> : vector<128xf32>
    %11 = vector.multi_reduction <add>, %10, %cst_8 [0] : vector<128x128xf32> to vector<128xf32>
    %12 = vector.shape_cast %11 : vector<128xf32> to vector<1x128xf32>
    %c0_9 = arith.constant 0 : index
    %13 = memref.load %arg5[%c0_9] : memref<1xf32, #tpu.memory_space<smem>>
    %14 = vector.broadcast %13 : f32 to vector<1x128xf32>
    %15 = arith.addf %12, %14 : vector<1x128xf32>
    %16 = math.tanh %15 : vector<1x128xf32>
    %c0_10 = arith.constant 0 : index
    %c0_11 = arith.constant 0 : index
    %17 = vector.load %arg6[%c0_10, %c0_11] : memref<1x128xf32, #tpu.memory_space<vmem>>, vector<1x128xf32>
    tpu.vector_store %arg6[%c0_10, %c0_11], %16 {strides = array<i32>} : memref<1x128xf32, #tpu.memory_space<vmem>>, vector<1x128xf32>,
    return
  }
  func.func @transform_0(%arg0: i32) -> (i32, i32) {
    %c0_i32 = arith.constant 0 : i32
    %c0_i32_0 = arith.constant 0 : i32
    return %c0_i32, %arg0 : i32, i32
  }
  func.func @transform_1(%arg0: i32) -> (i32, i32) {
    %c0_i32 = arith.constant 0 : i32
    %c0_i32_0 = arith.constant 0 : i32
    %c0_i32_1 = arith.constant 0 : i32
    return %c0_i32, %c0_i32_0 : i32, i32
  }
  func.func @transform_2(%arg0: i32) -> (i32, i32) {
    %c0_i32 = arith.constant 0 : i32
    %c0_i32_0 = arith.constant 0 : i32
    %c0_i32_1 = arith.constant 0 : i32
    return %c0_i32, %c0_i32_0 : i32, i32
  }
  func.func @transform_3(%arg0: i32) -> (i32, i32) {
    %c0_i32 = arith.constant 0 : i32
    %c0_i32_0 = arith.constant 0 : i32
    %c0_i32_1 = arith.constant 0 : i32
    return %c0_i32, %c0_i32_0 : i32, i32
  }
  func.func @transform_4(%arg0: i32) -> i32 {
    %c0_i32 = arith.constant 0 : i32
    %c0_i32_0 = arith.constant 0 : i32
    return %c0_i32 : i32
  }
  func.func @transform_5(%arg0: i32) -> (i32, i32) {
    %c0_i32 = arith.constant 0 : i32
    %c0_i32_0 = arith.constant 0 : i32
    return %c0_i32, %arg0 : i32, i32
  }
}

</mosaic_0001>

<llo_original>
// kernel: tpu_custom_call.1
$region0: #{tpu_custom_call.1}
  #allocation0 [shape = 'u32[]', space=smem, size = 0x4, offset = 0x4, fixed_abs, tag = 'smem constant byte address 0x4 - core index']
  #allocation1 [shape = 'u32[144,128]{1,0:T(1,128)}', space=vmem, size = 0x12000, scoped, tag = 'internal scratch']
  #allocation2 [shape = 'f32[1]{0:T(128)S(6)}', space=smem, size = 0x200, scoped, tag = 'scoped memory for tpu_custom_call.1']
  %s0 = inlined_call_operand.vmem [shape: f32[128,128], index: 0, kind: input, shape index: {}]
  %s1 = inlined_call_operand.vmem [shape: f32[128,128], index: 1, kind: input, shape index: {}]
  %s2 = inlined_call_operand.vmem [shape: f32[128,1], index: 2, kind: input, shape index: {}]
  %s3 = inlined_call_operand.vmem [shape: f32[128,1], index: 3, kind: input, shape index: {}]
  %s4 = inlined_call_operand.<no memory space> [shape: f32[1], index: 4, kind: input, shape index: {}]
  %s5 = inlined_call_operand.hbm [shape: f32[1,128], index: 5, kind: output, shape index: {}]
  %s6 = sld [smem:[#allocation0]]
  $region30: #{tpu_custom_call.1} parent=0
    _
  %s8 = ssub.s32 1, %s6
  %s9 = scalar_select 0, %s8, %s6
  %10 = sst [smem:[#allocation2]] %s4
  $region1: #{tpu_custom_call.1} parent=0
    #allocation3 [shape = 'u8[512]{0}', space=vmem, size = 0x400, scoped, tag = 'output window, operand 0, single buffered']
    #allocation4 [shape = 's32[1]{0}', space=sflag, size = 0x4, scoped, tag = 'scoped memory for tpu_custom_call.1']
    %11 = vsyncpa [#allocation4], 0
    // Predicated region
    $region2: #{tpu_custom_call.1} parent=1 // pred_check
      _
    $region3: #{tpu_custom_call.1} parent=1 // pred_check_branch
      %13 = sbr.rel (0) target = $region5
    $region4: #{tpu_custom_call.1} parent=1 // pred_region
      _
    $region5: #{tpu_custom_call.1} parent=1 // pred_fallthru
      _
    // Predicated region
    $region6: #{tpu_custom_call.1} parent=1 // pred_check
      _
    $region7: #{tpu_custom_call.1} parent=1 // pred_check_branch
      %15 = sbr.rel (0) target = $region9
    $region8: #{tpu_custom_call.1} parent=1 // pred_region
      _
    $region9: #{tpu_custom_call.1} parent=1 // pred_fallthru
      _
    // Predicated region
    $region10: #{tpu_custom_call.1} parent=1 // pred_check
      _
    $region11: #{tpu_custom_call.1} parent=1 // pred_check_branch
      %17 = sbr.rel (0) target = $region13
    $region12: #{tpu_custom_call.1} parent=1 // pred_region
      _
    $region13: #{tpu_custom_call.1} parent=1 // pred_fallthru
      _
    // Predicated region
    $region14: #{tpu_custom_call.1} parent=1 // pred_check
      _
    $region15: #{tpu_custom_call.1} parent=1 // pred_check_branch
      %19 = sbr.rel (0) target = $region17
    $region16: #{tpu_custom_call.1} parent=1 // pred_region
      _
    $region17: #{tpu_custom_call.1} parent=1 // pred_fallthru
      _
    // Predicated region
    $region18: #{tpu_custom_call.1} parent=1 // pred_check
      _
    $region19: #{tpu_custom_call.1} parent=1 // pred_check_branch
      %21 = sbr.rel (0) target = $region21
    $region20: #{tpu_custom_call.1} parent=1 // pred_region
      _
    $region21: #{tpu_custom_call.1} parent=1 // pred_fallthru
      _
    %v22 = vld [vmem:[%s1] sm:$0xff]
    %v23 = vld [vmem:[%s1 + $0x8] sm:$0xff]
    %v24 = vld [vmem:[%s1 + $0x10] sm:$0xff]
    %v25 = vld [vmem:[%s1 + $0x18] sm:$0xff]
    %v26 = vld [vmem:[%s1 + $0x20] sm:$0xff]
    %v27 = vld [vmem:[%s1 + $0x28] sm:$0xff]
    %v28 = vld [vmem:[%s1 + $0x30] sm:$0xff]
    %v29 = vld [vmem:[%s1 + $0x38] sm:$0xff]
    %v30 = vld [vmem:[%s1 + $0x40] sm:$0xff]
    %v31 = vld [vmem:[%s1 + $0x48] sm:$0xff]
    %v32 = vld [vmem:[%s1 + $0x50] sm:$0xff]
    %v33 = vld [vmem:[%s1 + $0x58] sm:$0xff]
    %v34 = vld [vmem:[%s1 + $0x60] sm:$0xff]
    %v35 = vld [vmem:[%s1 + $0x68] sm:$0xff]
    %v36 = vld [vmem:[%s1 + $0x70] sm:$0xff]
    %v37 = vld [vmem:[%s1 + $0x78] sm:$0xff]
    %v38 = vld [vmem:[%s0] sm:$0xff]
    %v39 = vld [vmem:[%s0 + $0x8] sm:$0xff]
    %v40 = vld [vmem:[%s0 + $0x10] sm:$0xff]
    %v41 = vld [vmem:[%s0 + $0x18] sm:$0xff]
    %v42 = vld [vmem:[%s0 + $0x20] sm:$0xff]
    %v43 = vld [vmem:[%s0 + $0x28] sm:$0xff]
    %v44 = vld [vmem:[%s0 + $0x30] sm:$0xff]
    %v45 = vld [vmem:[%s0 + $0x38] sm:$0xff]
    %v46 = vld [vmem:[%s0 + $0x40] sm:$0xff]
    %v47 = vld [vmem:[%s0 + $0x48] sm:$0xff]
    %v48 = vld [vmem:[%s0 + $0x50] sm:$0xff]
    %v49 = vld [vmem:[%s0 + $0x58] sm:$0xff]
    %v50 = vld [vmem:[%s0 + $0x60] sm:$0xff]
    %v51 = vld [vmem:[%s0 + $0x68] sm:$0xff]
    %v52 = vld [vmem:[%s0 + $0x70] sm:$0xff]
    %v53 = vld [vmem:[%s0 + $0x78] sm:$0xff]
    %v54 = vld [vmem:[%s2] sm:$0xff]
    %v55 = vld [vmem:[%s2 + $0x8] sm:$0xff]
    %v56 = vld [vmem:[%s2 + $0x10] sm:$0xff]
    %v57 = vld [vmem:[%s2 + $0x18] sm:$0xff]
    %v58 = vld [vmem:[%s2 + $0x20] sm:$0xff]
    %v59 = vld [vmem:[%s2 + $0x28] sm:$0xff]
    %v60 = vld [vmem:[%s2 + $0x30] sm:$0xff]
    %v61 = vld [vmem:[%s2 + $0x38] sm:$0xff]
    %v62 = vld [vmem:[%s2 + $0x40] sm:$0xff]
    %v63 = vld [vmem:[%s2 + $0x48] sm:$0xff]
    %v64 = vld [vmem:[%s2 + $0x50] sm:$0xff]
    %v65 = vld [vmem:[%s2 + $0x58] sm:$0xff]
    %v66 = vld [vmem:[%s2 + $0x60] sm:$0xff]
    %v67 = vld [vmem:[%s2 + $0x68] sm:$0xff]
    %v68 = vld [vmem:[%s2 + $0x70] sm:$0xff]
    %v69 = vld [vmem:[%s2 + $0x78] sm:$0xff]
    %71 = vset.pattern.permute.xlu0 0
    %72 = vperm.xlu0 %71, %v54
    %v73 = vpop.permute.xlu0 %72
    %76 = vset.pattern.permute.xlu0 0
    %77 = vperm.xlu0 %76, %v55
    %v78 = vpop.permute.xlu0 %77
    %81 = vset.pattern.permute.xlu0 0
    %82 = vperm.xlu0 %81, %v56
    %v83 = vpop.permute.xlu0 %82
    %86 = vset.pattern.permute.xlu0 0
    %87 = vperm.xlu0 %86, %v57
    %v88 = vpop.permute.xlu0 %87
    %91 = vset.pattern.permute.xlu0 0
    %92 = vperm.xlu0 %91, %v58
    %v93 = vpop.permute.xlu0 %92
    %96 = vset.pattern.permute.xlu0 0
    %97 = vperm.xlu0 %96, %v59
    %v98 = vpop.permute.xlu0 %97
    %101 = vset.pattern.permute.xlu0 0
    %102 = vperm.xlu0 %101, %v60
    %v103 = vpop.permute.xlu0 %102
    %106 = vset.pattern.permute.xlu0 0
    %107 = vperm.xlu0 %106, %v61
    %v108 = vpop.permute.xlu0 %107
    %111 = vset.pattern.permute.xlu0 0
    %112 = vperm.xlu0 %111, %v62
    %v113 = vpop.permute.xlu0 %112
    %116 = vset.pattern.permute.xlu0 0
    %117 = vperm.xlu0 %116, %v63
    %v118 = vpop.permute.xlu0 %117
    %121 = vset.pattern.permute.xlu0 0
    %122 = vperm.xlu0 %121, %v64
    %v123 = vpop.permute.xlu0 %122
    %126 = vset.pattern.permute.xlu0 0
    %127 = vperm.xlu0 %126, %v65
    %v128 = vpop.permute.xlu0 %127
    %131 = vset.pattern.permute.xlu0 0
    %132 = vperm.xlu0 %131, %v66
    %v133 = vpop.permute.xlu0 %132
    %136 = vset.pattern.permute.xlu0 0
    %137 = vperm.xlu0 %136, %v67
    %v138 = vpop.permute.xlu0 %137
    %141 = vset.pattern.permute.xlu0 0
    %142 = vperm.xlu0 %141, %v68
    %v143 = vpop.permute.xlu0 %142
    %146 = vset.pattern.permute.xlu0 0
    %147 = vperm.xlu0 %146, %v69
    %v148 = vpop.permute.xlu0 %147
    %150 = vmatprep.subr.mxu0 0.0
    %151 = vmatpush1.msra.mxu0 %v53
    %152 = vmatprep.subr.mxu0 0.0
    %153 = vmatpush1.msra.mxu0 %v52
    %154 = vmatprep.subr.mxu0 0.0
    %155 = vmatpush1.msra.mxu0 %v51
    %156 = vmatprep.subr.mxu0 0.0
    %157 = vmatpush1.msra.mxu0 %v50
    %158 = vmatprep.subr.mxu0 0.0
    %159 = vmatpush1.msra.mxu0 %v49
    %160 = vmatprep.subr.mxu0 0.0
    %161 = vmatpush1.msra.mxu0 %v48
    %162 = vmatprep.subr.mxu0 0.0
    %163 = vmatpush1.msra.mxu0 %v47
    %164 = vmatprep.subr.mxu0 0.0
    %165 = vmatpush1.msra.mxu0 %v46
    %166 = vmatprep.subr.mxu0 0.0
    %167 = vmatpush1.msra.mxu0 %v45
    %168 = vmatprep.subr.mxu0 0.0
    %169 = vmatpush1.msra.mxu0 %v44
    %170 = vmatprep.subr.mxu0 0.0
    %171 = vmatpush1.msra.mxu0 %v43
    %172 = vmatprep.subr.mxu0 0.0
    %173 = vmatpush1.msra.mxu0 %v42
    %174 = vmatprep.subr.mxu0 0.0
    %175 = vmatpush1.msra.mxu0 %v41
    %176 = vmatprep.subr.mxu0 0.0
    %177 = vmatpush1.msra.mxu0 %v40
    %178 = vmatprep.subr.mxu0 0.0
    %179 = vmatpush1.msra.mxu0 %v39
    %180 = vmatprep.subr.mxu0 0.0
    %181 = vmatpush1.msra.mxu0 %v38
    %182 = vmatprep.subr.mxu0 0.0
    %183 = vmatpush2.msra.mxu0 0.0
    %184 = vmatprep.subr.mxu0 0.0
    %185 = vmatpush2.msra.mxu0 0.0
    %186 = vmatprep.subr.mxu0 0.0
    %187 = vmatpush2.msra.mxu0 0.0
    %188 = vmatprep.subr.mxu0 0.0
    %189 = vmatpush2.msra.mxu0 0.0
    %190 = vmatprep.subr.mxu0 0.0
    %191 = vmatpush2.msra.mxu0 0.0
    %192 = vmatprep.subr.mxu0 0.0
    %193 = vmatpush2.msra.mxu0 0.0
    %194 = vmatprep.subr.mxu0 0.0
    %195 = vmatpush2.msra.mxu0 0.0
    %196 = vmatprep.subr.mxu0 0.0
    %197 = vmatpush2.msra.mxu0 0.0
    %198 = vmatprep.subr.mxu0 0.0
    %199 = vmatpush2.msra.mxu0 0.0
    %200 = vmatprep.subr.mxu0 0.0
    %201 = vmatpush2.msra.mxu0 0.0
    %202 = vmatprep.subr.mxu0 0.0
    %203 = vmatpush2.msra.mxu0 0.0
    %204 = vmatprep.subr.mxu0 0.0
    %205 = vmatpush2.msra.mxu0 0.0
    %206 = vmatprep.subr.mxu0 0.0
    %207 = vmatpush2.msra.mxu0 0.0
    %208 = vmatprep.subr.mxu0 0.0
    %209 = vmatpush2.msra.mxu0 0.0
    %210 = vmatprep.subr.mxu0 0.0
    %211 = vmatpush2.msra.mxu0 0.0
    %212 = vmatprep.subr.mxu0 0.0
    %213 = vmatpush2.msra.mxu0 0.0
    %214 = vmatprep.mubr.f32.mxu0 0.0
    %215 = vmatmul.mubr.f32.gmra.mxu0 %v22
    %v216 = vpop.f32.mrf.mxu0
    %v217 = vadd.f32 %v73, %v216
    %v218 = vpop.f32.mrf.mxu0
    %219 = vmatprep.mubr.f32.mxu0 0.0
    %220 = vmatmul.mubr.f32.gmra.mxu0 %v23
    %v221 = vpop.f32.mrf.mxu0
    %v222 = vadd.f32 %v78, %v221
    %v223 = vpop.f32.mrf.mxu0
    %224 = vmatprep.mubr.f32.mxu0 0.0
    %225 = vmatmul.mubr.f32.gmra.mxu0 %v24
    %v226 = vpop.f32.mrf.mxu0
    %v227 = vadd.f32 %v83, %v226
    %v228 = vpop.f32.mrf.mxu0
    %229 = vmatprep.mubr.f32.mxu0 0.0
    %230 = vmatmul.mubr.f32.gmra.mxu0 %v25
    %v231 = vpop.f32.mrf.mxu0
    %v232 = vadd.f32 %v88, %v231
    %v233 = vpop.f32.mrf.mxu0
    %234 = vmatprep.mubr.f32.mxu0 0.0
    %235 = vmatmul.mubr.f32.gmra.mxu0 %v26
    %v236 = vpop.f32.mrf.mxu0
    %v237 = vadd.f32 %v93, %v236
    %v238 = vpop.f32.mrf.mxu0
    %239 = vmatprep.mubr.f32.mxu0 0.0
    %240 = vmatmul.mubr.f32.gmra.mxu0 %v27
    %v241 = vpop.f32.mrf.mxu0
    %v242 = vadd.f32 %v98, %v241
    %v243 = vpop.f32.mrf.mxu0
    %244 = vmatprep.mubr.f32.mxu0 0.0
    %245 = vmatmul.mubr.f32.gmra.mxu0 %v28
    %v246 = vpop.f32.mrf.mxu0
    %v247 = vadd.f32 %v103, %v246
    %v248 = vpop.f32.mrf.mxu0
    %249 = vmatprep.mubr.f32.mxu0 0.0
    %250 = vmatmul.mubr.f32.gmra.mxu0 %v29
    %v251 = vpop.f32.mrf.mxu0
    %v252 = vadd.f32 %v108, %v251
    %v253 = vpop.f32.mrf.mxu0
    %254 = vmatprep.mubr.f32.mxu0 0.0
    %255 = vmatmul.mubr.f32.gmra.mxu0 %v30
    %v256 = vpop.f32.mrf.mxu0
    %v257 = vadd.f32 %v113, %v256
    %v258 = vpop.f32.mrf.mxu0
    %259 = vmatprep.mubr.f32.mxu0 0.0
    %260 = vmatmul.mubr.f32.gmra.mxu0 %v31
    %v261 = vpop.f32.mrf.mxu0
    %v262 = vadd.f32 %v118, %v261
    %v263 = vpop.f32.mrf.mxu0
    %264 = vmatprep.mubr.f32.mxu0 0.0
    %265 = vmatmul.mubr.f32.gmra.mxu0 %v32
    %v266 = vpop.f32.mrf.mxu0
    %v267 = vadd.f32 %v123, %v266
    %v268 = vpop.f32.mrf.mxu0
    %269 = vmatprep.mubr.f32.mxu0 0.0
    %270 = vmatmul.mubr.f32.gmra.mxu0 %v33
    %v271 = vpop.f32.mrf.mxu0
    %v272 = vadd.f32 %v128, %v271
    %v273 = vpop.f32.mrf.mxu0
    %274 = vmatprep.mubr.f32.mxu0 0.0
    %275 = vmatmul.mubr.f32.gmra.mxu0 %v34
    %v276 = vpop.f32.mrf.mxu0
    %v277 = vadd.f32 %v133, %v276
    %v278 = vpop.f32.mrf.mxu0
    %279 = vmatprep.mubr.f32.mxu0 0.0
    %280 = vmatmul.mubr.f32.gmra.mxu0 %v35
    %v281 = vpop.f32.mrf.mxu0
    %v282 = vadd.f32 %v138, %v281
    %v283 = vpop.f32.mrf.mxu0
    %284 = vmatprep.mubr.f32.mxu0 0.0
    %285 = vmatmul.mubr.f32.gmra.mxu0 %v36
    %v286 = vpop.f32.mrf.mxu0
    %v287 = vadd.f32 %v143, %v286
    %v288 = vpop.f32.mrf.mxu0
    %289 = vmatprep.mubr.f32.mxu0 0.0
    %290 = vmatmul.mubr.f32.gmra.mxu0 %v37
    %v291 = vpop.f32.mrf.mxu0
    %v292 = vadd.f32 %v148, %v291
    %v293 = vpop.f32.mrf.mxu0
    %294 = vdwg.mxu0
    %v295 = vmax.f32 %v217, 0.0
    %v296 = vmax.f32 %v222, 0.0
    %v297 = vmax.f32 %v227, 0.0
    %v298 = vmax.f32 %v232, 0.0
    %v299 = vmax.f32 %v237, 0.0
    %v300 = vmax.f32 %v242, 0.0
    %v301 = vmax.f32 %v247, 0.0
    %v302 = vmax.f32 %v252, 0.0
    %v303 = vmax.f32 %v257, 0.0
    %v304 = vmax.f32 %v262, 0.0
    %v305 = vmax.f32 %v267, 0.0
    %v306 = vmax.f32 %v272, 0.0
    %v307 = vmax.f32 %v277, 0.0
    %v308 = vmax.f32 %v282, 0.0
    %v309 = vmax.f32 %v287, 0.0
    %v310 = vmax.f32 %v292, 0.0
    %v311 = vld [vmem:[%s3] sm:$0xff]
    %v312 = vld [vmem:[%s3 + $0x8] sm:$0xff]
    %v313 = vld [vmem:[%s3 + $0x10] sm:$0xff]
    %v314 = vld [vmem:[%s3 + $0x18] sm:$0xff]
    %v315 = vld [vmem:[%s3 + $0x20] sm:$0xff]
    %v316 = vld [vmem:[%s3 + $0x28] sm:$0xff]
    %v317 = vld [vmem:[%s3 + $0x30] sm:$0xff]
    %v318 = vld [vmem:[%s3 + $0x38] sm:$0xff]
    %v319 = vld [vmem:[%s3 + $0x40] sm:$0xff]
    %v320 = vld [vmem:[%s3 + $0x48] sm:$0xff]
    %v321 = vld [vmem:[%s3 + $0x50] sm:$0xff]
    %v322 = vld [vmem:[%s3 + $0x58] sm:$0xff]
    %v323 = vld [vmem:[%s3 + $0x60] sm:$0xff]
    %v324 = vld [vmem:[%s3 + $0x68] sm:$0xff]
    %v325 = vld [vmem:[%s3 + $0x70] sm:$0xff]
    %v326 = vld [vmem:[%s3 + $0x78] sm:$0xff]
    %328 = vset.pattern.permute.xlu0 0
    %329 = vperm.xlu0 %328, %v311
    %v330 = vpop.permute.xlu0 %329
    %333 = vset.pattern.permute.xlu0 0
    %334 = vperm.xlu0 %333, %v312
    %v335 = vpop.permute.xlu0 %334
    %338 = vset.pattern.permute.xlu0 0
    %339 = vperm.xlu0 %338, %v313
    %v340 = vpop.permute.xlu0 %339
    %343 = vset.pattern.permute.xlu0 0
    %344 = vperm.xlu0 %343, %v314
    %v345 = vpop.permute.xlu0 %344
    %348 = vset.pattern.permute.xlu0 0
    %349 = vperm.xlu0 %348, %v315
    %v350 = vpop.permute.xlu0 %349
    %353 = vset.pattern.permute.xlu0 0
    %354 = vperm.xlu0 %353, %v316
    %v355 = vpop.permute.xlu0 %354
    %358 = vset.pattern.permute.xlu0 0
    %359 = vperm.xlu0 %358, %v317
    %v360 = vpop.permute.xlu0 %359
    %363 = vset.pattern.permute.xlu0 0
    %364 = vperm.xlu0 %363, %v318
    %v365 = vpop.permute.xlu0 %364
    %368 = vset.pattern.permute.xlu0 0
    %369 = vperm.xlu0 %368, %v319
    %v370 = vpop.permute.xlu0 %369
    %373 = vset.pattern.permute.xlu0 0
    %374 = vperm.xlu0 %373, %v320
    %v375 = vpop.permute.xlu0 %374
    %378 = vset.pattern.permute.xlu0 0
    %379 = vperm.xlu0 %378, %v321
    %v380 = vpop.permute.xlu0 %379
    %383 = vset.pattern.permute.xlu0 0
    %384 = vperm.xlu0 %383, %v322
    %v385 = vpop.permute.xlu0 %384
    %388 = vset.pattern.permute.xlu0 0
    %389 = vperm.xlu0 %388, %v323
    %v390 = vpop.permute.xlu0 %389
    %393 = vset.pattern.permute.xlu0 0
    %394 = vperm.xlu0 %393, %v324
    %v395 = vpop.permute.xlu0 %394
    %398 = vset.pattern.permute.xlu0 0
    %399 = vperm.xlu0 %398, %v325
    %v400 = vpop.permute.xlu0 %399
    %403 = vset.pattern.permute.xlu0 0
    %404 = vperm.xlu0 %403, %v326
    %v405 = vpop.permute.xlu0 %404
    %v407 = vmul.f32 %v295, %v330
    %v408 = vmul.f32 %v296, %v335
    %v409 = vmul.f32 %v297, %v340
    %v410 = vmul.f32 %v298, %v345
    %v411 = vmul.f32 %v299, %v350
    %v412 = vmul.f32 %v300, %v355
    %v413 = vmul.f32 %v301, %v360
    %v414 = vmul.f32 %v302, %v365
    %v415 = vmul.f32 %v303, %v370
    %v416 = vmul.f32 %v304, %v375
    %v417 = vmul.f32 %v305, %v380
    %v418 = vmul.f32 %v306, %v385
    %v419 = vmul.f32 %v307, %v390
    %v420 = vmul.f32 %v308, %v395
    %v421 = vmul.f32 %v309, %v400
    %v422 = vmul.f32 %v310, %v405
    %v423 = vadd.f32 %v407, %v408
    %v424 = vadd.f32 %v423, %v409
    %v425 = vadd.f32 %v424, %v410
    %v426 = vadd.f32 %v425, %v411
    %v427 = vadd.f32 %v426, %v412
    %v428 = vadd.f32 %v427, %v413
    %v429 = vadd.f32 %v428, %v414
    %v430 = vadd.f32 %v429, %v415
    %v431 = vadd.f32 %v430, %v416
    %v432 = vadd.f32 %v431, %v417
    %v433 = vadd.f32 %v432, %v418
    %v434 = vadd.f32 %v433, %v419
    %v435 = vadd.f32 %v434, %v420
    %v436 = vadd.f32 %v435, %v421
    %v437 = vadd.f32 %v436, %v422
    %v438 = vrot.slane %v437, 4
    %v439 = vadd.f32 %v437, %v438
    %v440 = vrot.slane %v439, 2
    %v441 = vadd.f32 %v439, %v440
    %v442 = vrot.slane %v441, 1
    %v443 = vadd.f32 %v441, %v442
    %s444 = sld [smem:[#allocation2]]
    %v445 = vstv %s444
    %v446 = vadd.f32 %v443, %v445
    %v447 = vtanh.pop %v446
    %448 = vst [vmem:[#allocation3] sm:$0x1] %v447
    // Predicated region
    $region22: #{tpu_custom_call.1} parent=1 // pred_check
      _
    $region23: #{tpu_custom_call.1} parent=1 // pred_check_branch
      %450 = sbr.rel (0) target = $region25
    $region24: #{tpu_custom_call.1} parent=1 // pred_region
      %s452 = ssub.s32 16, 16
      %453 = vsyncadd [#allocation4], %s452
      %s455 = sshll.u32 [#allocation3], 4
      %s456 = int_to_ptr.vmem [resolvable:$true] %s455
      %458 = dma.vmem_to_hbm [thread:$0]  %s456, 16, %s5, [#allocation4]
    $region25: #{tpu_custom_call.1} parent=1 // pred_fallthru
      _
    // Predicated region
    $region26: #{tpu_custom_call.1} parent=1 // pred_check
      _
    $region27: #{tpu_custom_call.1} parent=1 // pred_check_branch
      %460 = sbr.rel (0) target = $region29
    $region28: #{tpu_custom_call.1} parent=1 // pred_region
      %461 = dma.done [#allocation4], 16
    $region29: #{tpu_custom_call.1} parent=1 // pred_fallthru
      _
    %462 = vsyncpa [#allocation4], 1

</llo_original>
